<compile_context>
chip_gen: v7x
topology: tpu7x:2x2x1
jax: 0.10.0
libtpu: 0.0.40
codegen_flags: <defaults>
</compile_context>

<pallas_src>
import jax
import jax.numpy as jnp
from jax.experimental import pallas as pl
from jax.experimental.pallas import tpu as pltpu


D_IN = 28 * 28      # 784
HID = 128
N_OUT = 10
N_PAD = 128         # lane-dense padded width for the 2nd-layer weights
TB_DEFAULT = 2048   # batch tile (rows); ~12.5 MiB double-buffered f32 x tile
MIN_SPLIT = 512     # from this batch size on, force >=2 grid steps (v7x cores)


def _round_up(x, m):
    return ((x + m - 1) // m) * m


def mlp_kernel(x_ref, w1_ref, b1_ref, w2_ref, b2_ref, o_ref):
    # x_ref : (TB, 784) f32   -- cast to bf16 in-kernel (VPU has huge slack)
    # w1_ref: (784, 128) bf16, b1_ref: (1, 128) f32
    # w2_ref: (128, 128) bf16 (cols 10..127 zero), b2_ref: (1, 128) f32
    # o_ref : (TB, 10)  f32   -- narrow, unpadded logits
    x = x_ref[...].astype(jnp.bfloat16)
    h = jnp.dot(x, w1_ref[...], preferred_element_type=jnp.float32)
    h = jnp.maximum(h + b1_ref[...], 0.0)            # f32 bias + ReLU epilogue
    out = jnp.dot(h.astype(jnp.bfloat16), w2_ref[...],
                  preferred_element_type=jnp.float32)
    out = out + b2_ref[...]
    o_ref[...] = out[:, :N_OUT].astype(o_ref.dtype)


def prepare_params(w1, b1, w2, b2):
    """One-time parameter prep (hoisted out of the per-call path)."""
    w1b = w1.astype(jnp.bfloat16)
    b1r = b1.reshape(1, HID).astype(jnp.float32)
    w2p = jnp.zeros((HID, N_PAD), jnp.bfloat16).at[:, :N_OUT].set(
        w2.astype(jnp.bfloat16))
    b2p = jnp.zeros((1, N_PAD), jnp.float32).at[:, :N_OUT].set(
        b2.reshape(1, N_OUT).astype(jnp.float32))
    return w1b, b1r, w2p, b2p


def _choose_tiling(B, tb):
    """Pick (n_steps, tb_eff, Bp): bounded pad waste, >=2 steps for big B."""
    B8 = _round_up(B, 8)
    n_steps = max(1, -(-B8 // tb))               # cdiv
    if B8 >= MIN_SPLIT and n_steps < 2:
        n_steps = 2                              # keep both v7x TCs busy
    tb_eff = _round_up(-(-B8 // n_steps), 8)     # 8-row aligned tile
    Bp = n_steps * tb_eff                        # pad waste <= 8 * n_steps rows
    return n_steps, tb_eff, Bp


def net_forward(x, params, *, tb=TB_DEFAULT):
    """x: (B, 1, 28, 28) float32 (NCHW, like PyTorch). Returns (B, 10) f32."""
    w1b, b1r, w2p, b2p = params
    B = x.shape[0]
    x_flat = x.reshape(B, -1)                    # torch.flatten(x, 1); f32, free

    n_steps, tb_eff, Bp = _choose_tiling(B, tb)
    if Bp != B:
        x_flat = jnp.pad(x_flat, ((0, Bp - B), (0, 0)))

    cost = pl.CostEstimate(
        flops=2 * Bp * (D_IN * HID + HID * N_PAD),
        transcendentals=0,
        bytes_accessed=(Bp * D_IN * 4                     # x (f32)
                        + (D_IN * HID + HID * N_PAD) * 2  # weights (bf16)
                        + (HID + N_PAD) * 4               # biases (f32)
                        + Bp * N_OUT * 4),                # output (f32)
    )

    out = pl.pallas_call(
        mlp_kernel,
        out_shape=jax.ShapeDtypeStruct((Bp, N_OUT), jnp.float32),
        grid_spec=pltpu.PrefetchScalarGridSpec(
            num_scalar_prefetch=0,
            grid=(n_steps,),
            in_specs=[
                pl.BlockSpec((tb_eff, D_IN), lambda i: (i, 0)),  # x streams
                pl.BlockSpec((D_IN, HID), lambda i: (0, 0)),     # w1 resident
                pl.BlockSpec((1, HID), lambda i: (0, 0)),        # b1 resident
                pl.BlockSpec((HID, N_PAD), lambda i: (0, 0)),    # w2 resident
                pl.BlockSpec((1, N_PAD), lambda i: (0, 0)),      # b2 resident
            ],
            out_specs=pl.BlockSpec((tb_eff, N_OUT), lambda i: (i, 0)),
        ),
        compiler_params=pltpu.CompilerParams(
            dimension_semantics=("parallel",),
            vmem_limit_bytes=32 * 1024 * 1024,
        ),
        cost_estimate=cost,
    )(x_flat, w1b, b1r, w2p, b2p)

    return out[:B] if Bp != B else out


def init_params(key):
    """Deterministic params matching nn.Linear(784,128) and nn.Linear(128,10).

    PyTorch default init scheme (uniform +/- 1/sqrt(fan_in)), JAX RNG for
    determinism. Weights stored as (in_features, out_features) so the kernel
    computes x @ W + b.
    """
    k1, k2, k3, k4 = jax.random.split(key, 4)
    bound1 = 1.0 / jnp.sqrt(float(D_IN))
    bound2 = 1.0 / jnp.sqrt(float(HID))
    w1 = jax.random.uniform(k1, (D_IN, HID), jnp.float32, -bound1, bound1)
    b1 = jax.random.uniform(k2, (HID,), jnp.float32, -bound1, bound1)
    w2 = jax.random.uniform(k3, (HID, N_OUT), jnp.float32, -bound2, bound2)
    b2 = jax.random.uniform(k4, (N_OUT,), jnp.float32, -bound2, bound2)
    return w1, b1, w2, b2


def _reference(x, w1, b1, w2, b2):
    """Plain-JAX reference applying the same bf16-input / f32-accumulate
    casting as the kernel (tight numerical check of self-consistency; the
    bf16 casts are a deliberate deviation from the all-f32 PyTorch model)."""
    B = x.shape[0]
    xf = x.reshape(B, -1).astype(jnp.bfloat16).astype(jnp.float32)
    w1f = w1.astype(jnp.bfloat16).astype(jnp.float32)
    w2f = w2.astype(jnp.bfloat16).astype(jnp.float32)
    h = jnp.maximum(xf @ w1f + b1, 0.0)
    h = h.astype(jnp.bfloat16).astype(jnp.float32)
    return h @ w2f + b2


if __name__ == "__main__":
    key = jax.random.PRNGKey(0)
    kx, kp = jax.random.split(key)

    B = 8
    x = jax.random.normal(kx, (B, 1, 28, 28), jnp.float32)   # NCHW, like MNIST
    w1, b1, w2, b2 = init_params(kp)
    params = prepare_params(w1, b1, w2, b2)                   # one-time prep

    out = net_forward(x, params)
    out = jax.block_until_ready(out)

    ref = _reference(x, w1, b1, w2, b2)
    assert out.shape == (B, N_OUT)
    assert jnp.allclose(out, ref, atol=1e-2, rtol=1e-2), (
        float(jnp.max(jnp.abs(out - ref))))

    print("KERNEL_OK")
</pallas_src>

<mosaic_0001>
module attributes {stable_mosaic.version = 11 : i64} {
  func.func @mlp_kernel(%arg0: i32, %arg1: memref<8x784xf32, #tpu.memory_space<vmem>>, %arg2: memref<784x128xbf16, #tpu.memory_space<vmem>>, %arg3: memref<1x128xf32, #tpu.memory_space<vmem>>, %arg4: memref<128x128xbf16, #tpu.memory_space<vmem>>, %arg5: memref<1x128xf32, #tpu.memory_space<vmem>>, %arg6: memref<8x10xf32, #tpu.memory_space<vmem>>) attributes {dimension_semantics = [#tpu.dimension_semantics<parallel>], iteration_bounds = array<i64: 1>, scalar_prefetch = 0 : i64, scratch_operands = 0 : i64, tpu.core_type = #tpu.core_type<tc>, window_params = [{transform_indices = @transform_0, window_bounds = array<i64: 8, 784>}, {pipeline_mode = #tpu.pipeline_mode<synchronous>, transform_indices = @transform_1, window_bounds = array<i64: 784, 128>}, {pipeline_mode = #tpu.pipeline_mode<synchronous>, transform_indices = @transform_2, window_bounds = array<i64: 1, 128>}, {pipeline_mode = #tpu.pipeline_mode<synchronous>, transform_indices = @transform_3, window_bounds = array<i64: 128, 128>}, {pipeline_mode = #tpu.pipeline_mode<synchronous>, transform_indices = @transform_4, window_bounds = array<i64: 1, 128>}, {transform_indices = @transform_5, window_bounds = array<i64: 8, 10>}]} {
    %c0 = arith.constant 0 : index
    %c0_0 = arith.constant 0 : index
    %0 = vector.load %arg1[%c0, %c0_0] : memref<8x784xf32, #tpu.memory_space<vmem>>, vector<8x784xf32>
    %1 = arith.truncf %0 : vector<8x784xf32> to vector<8x784xbf16>
    %c0_1 = arith.constant 0 : index
    %c0_2 = arith.constant 0 : index
    %2 = vector.load %arg2[%c0_1, %c0_2] : memref<784x128xbf16, #tpu.memory_space<vmem>>, vector<784x128xbf16>
    %cst = arith.constant dense<0.000000e+00> : vector<8x128xf32>
    %3 = tpu.matmul %1, %2, %cst {dimension_numbers = #tpu.dot_dimension_numbers<[1], [0], [0], [1], [0, 0, 1, 1], [], []>} : vector<8x784xbf16>, vector<784x128xbf16>, vector<8x128xf32> -> vector<8x128xf32>
    %c0_3 = arith.constant 0 : index
    %c0_4 = arith.constant 0 : index
    %4 = vector.load %arg3[%c0_3, %c0_4] : memref<1x128xf32, #tpu.memory_space<vmem>>, vector<1x128xf32>
    %5 = vector.broadcast %4 : vector<1x128xf32> to vector<8x128xf32>
    %6 = arith.addf %3, %5 : vector<8x128xf32>
    %cst_5 = arith.constant 0.000000e+00 : f32
    %7 = vector.broadcast %cst_5 : f32 to vector<8x128xf32>
    %8 = arith.maximumf %6, %7 : vector<8x128xf32>
    %9 = arith.truncf %8 : vector<8x128xf32> to vector<8x128xbf16>
    %c0_6 = arith.constant 0 : index
    %c0_7 = arith.constant 0 : index
    %10 = vector.load %arg4[%c0_6, %c0_7] : memref<128x128xbf16, #tpu.memory_space<vmem>>, vector<128x128xbf16>
    %cst_8 = arith.constant dense<0.000000e+00> : vector<8x128xf32>
    %11 = tpu.matmul %9, %10, %cst_8 {dimension_numbers = #tpu.dot_dimension_numbers<[1], [0], [0], [1], [0, 0, 1, 1], [], []>} : vector<8x128xbf16>, vector<128x128xbf16>, vector<8x128xf32> -> vector<8x128xf32>
    %c0_9 = arith.constant 0 : index
    %c0_10 = arith.constant 0 : index
    %12 = vector.load %arg5[%c0_9, %c0_10] : memref<1x128xf32, #tpu.memory_space<vmem>>, vector<1x128xf32>
    %13 = vector.broadcast %12 : vector<1x128xf32> to vector<8x128xf32>
    %14 = arith.addf %11, %13 : vector<8x128xf32>
    %15 = vector.extract_strided_slice %14 {offsets = [0, 0], sizes = [8, 10], strides = [1, 1]} : vector<8x128xf32> to vector<8x10xf32>
    %c0_11 = arith.constant 0 : index
    %c0_12 = arith.constant 0 : index
    %16 = vector.load %arg6[%c0_11, %c0_12] : memref<8x10xf32, #tpu.memory_space<vmem>>, vector<8x10xf32>
    tpu.vector_store %arg6[%c0_11, %c0_12], %15 {strides = array<i32>} : memref<8x10xf32, #tpu.memory_space<vmem>>, vector<8x10xf32>,
    return
  }
  func.func @transform_0(%arg0: i32) -> (i32, i32) {
    %c0_i32 = arith.constant 0 : i32
    %c0_i32_0 = arith.constant 0 : i32
    return %arg0, %c0_i32 : i32, i32
  }
  func.func @transform_1(%arg0: i32) -> (i32, i32) {
    %c0_i32 = arith.constant 0 : i32
    %c0_i32_0 = arith.constant 0 : i32
    %c0_i32_1 = arith.constant 0 : i32
    return %c0_i32, %c0_i32_0 : i32, i32
  }
  func.func @transform_2(%arg0: i32) -> (i32, i32) {
    %c0_i32 = arith.constant 0 : i32
    %c0_i32_0 = arith.constant 0 : i32
    %c0_i32_1 = arith.constant 0 : i32
    return %c0_i32, %c0_i32_0 : i32, i32
  }
  func.func @transform_3(%arg0: i32) -> (i32, i32) {
    %c0_i32 = arith.constant 0 : i32
    %c0_i32_0 = arith.constant 0 : i32
    %c0_i32_1 = arith.constant 0 : i32
    return %c0_i32, %c0_i32_0 : i32, i32
  }
  func.func @transform_4(%arg0: i32) -> (i32, i32) {
    %c0_i32 = arith.constant 0 : i32
    %c0_i32_0 = arith.constant 0 : i32
    %c0_i32_1 = arith.constant 0 : i32
    return %c0_i32, %c0_i32_0 : i32, i32
  }
  func.func @transform_5(%arg0: i32) -> (i32, i32) {
    %c0_i32 = arith.constant 0 : i32
    %c0_i32_0 = arith.constant 0 : i32
    return %arg0, %c0_i32 : i32, i32
  }
}

</mosaic_0001>

<llo_original>
// kernel: tpu_custom_call.1
$region0: #{tpu_custom_call.1}
  #allocation0 [shape = 'u32[]', space=smem, size = 0x4, offset = 0x4, fixed_abs, tag = 'smem constant byte address 0x4 - core index']
  #allocation1 [shape = 'u32[144,128]{1,0:T(1,128)}', space=vmem, size = 0x12000, scoped, tag = 'internal scratch']
  %s0 = inlined_call_operand.hbm [shape: f32[8,784], index: 0, kind: input, shape index: {}]
  %s1 = inlined_call_operand.hbm [shape: bf16[784,128], index: 1, kind: input, shape index: {}]
  %s2 = inlined_call_operand.vmem [shape: f32[1,128], index: 2, kind: input, shape index: {}]
  %s3 = inlined_call_operand.hbm [shape: bf16[128,128], index: 3, kind: input, shape index: {}]
  %s4 = inlined_call_operand.vmem [shape: f32[1,128], index: 4, kind: input, shape index: {}]
  %s5 = inlined_call_operand.hbm [shape: f32[8,10], index: 5, kind: output, shape index: {}]
  %s6 = sld [smem:[#allocation0]]
  $region42: #{tpu_custom_call.1} parent=0
    _
  %s8 = ssub.s32 1, %s6
  %s9 = scalar_select 0, %s8, %s6
  $region1: #{tpu_custom_call.1} parent=0
    #allocation2 [shape = 'u8[28672]{0}', space=vmem, size = 0x7000, scoped, tag = 'input window, operand 0, single buffered']
    #allocation3 [shape = 's32[1]{0}', space=sflag, size = 0x4, scoped, tag = 'scoped memory for tpu_custom_call.1']
    #allocation4 [shape = 's32[1]{0}', space=sflag, size = 0x4, scoped, tag = 'scoped memory for tpu_custom_call.1']
    #allocation5 [shape = 'u8[200704]{0}', space=vmem, size = 0x31000, scoped, tag = 'input window, operand 1, single buffered']
    #allocation6 [shape = 's32[1]{0}', space=sflag, size = 0x4, scoped, tag = 'scoped memory for tpu_custom_call.1']
    #allocation7 [shape = 'u8[32768]{0}', space=vmem, size = 0x8000, scoped, tag = 'input window, operand 3, single buffered']
    #allocation8 [shape = 'u8[4096]{0}', space=vmem, size = 0x1000, scoped, tag = 'output window, operand 0, single buffered']
    %10 = vsyncpa [#allocation3], 0
    %11 = vsyncpa [#allocation6], 0
    %12 = vsyncpa [#allocation4], 0
    // Predicated region
    $region2: #{tpu_custom_call.1} parent=1 // pred_check
      _
    $region3: #{tpu_custom_call.1} parent=1 // pred_check_branch
      %14 = sbr.rel (0) target = $region5
    $region4: #{tpu_custom_call.1} parent=1 // pred_region
      %s16 = ssub.s32 896, 896
      %17 = vsyncadd [#allocation3], %s16
      %s19 = sshll.u32 [#allocation2], 4
      %s20 = int_to_ptr.vmem [resolvable:$true] %s19
      %22 = dma.hbm_to_vmem [thread:$0]  %s0, 896, %s20, [#allocation3]
    $region5: #{tpu_custom_call.1} parent=1 // pred_fallthru
      _
    // Predicated region
    $region6: #{tpu_custom_call.1} parent=1 // pred_check
      _
    $region7: #{tpu_custom_call.1} parent=1 // pred_check_branch
      %24 = sbr.rel (0) target = $region9
    $region8: #{tpu_custom_call.1} parent=1 // pred_region
      %s26 = ssub.s32 6272, 6272
      %27 = vsyncadd [#allocation6], %s26
      %s28 = sshll.u32 [#allocation5], 4
      %s29 = int_to_ptr.vmem [resolvable:$true] %s28
      %34 = dma.hbm_to_vmem [thread:$0]  %s1, 6272, %s29, [#allocation6], 64, 64, 4
    $region9: #{tpu_custom_call.1} parent=1 // pred_fallthru
      _
    // Predicated region
    $region10: #{tpu_custom_call.1} parent=1 // pred_check
      _
    $region11: #{tpu_custom_call.1} parent=1 // pred_check_branch
      %36 = sbr.rel (0) target = $region13
    $region12: #{tpu_custom_call.1} parent=1 // pred_region
      _
    $region13: #{tpu_custom_call.1} parent=1 // pred_fallthru
      _
    // Predicated region
    $region14: #{tpu_custom_call.1} parent=1 // pred_check
      _
    $region15: #{tpu_custom_call.1} parent=1 // pred_check_branch
      %38 = sbr.rel (0) target = $region17
    $region16: #{tpu_custom_call.1} parent=1 // pred_region
      %s40 = ssub.s32 1024, 1024
      %41 = vsyncadd [#allocation6], %s40
      %s42 = sshll.u32 [#allocation7], 4
      %s43 = int_to_ptr.vmem [resolvable:$true] %s42
      %48 = dma.hbm_to_vmem [thread:$0]  %s3, 1024, %s43, [#allocation6], 64, 64, 4
    $region17: #{tpu_custom_call.1} parent=1 // pred_fallthru
      _
    // Predicated region
    $region18: #{tpu_custom_call.1} parent=1 // pred_check
      _
    $region19: #{tpu_custom_call.1} parent=1 // pred_check_branch
      %50 = sbr.rel (0) target = $region21
    $region20: #{tpu_custom_call.1} parent=1 // pred_region
      _
    $region21: #{tpu_custom_call.1} parent=1 // pred_fallthru
      _
    // Predicated region
    $region22: #{tpu_custom_call.1} parent=1 // pred_check
      _
    $region23: #{tpu_custom_call.1} parent=1 // pred_check_branch
      %52 = sbr.rel (0) target = $region25
    $region24: #{tpu_custom_call.1} parent=1 // pred_region
      %53 = dma.done [#allocation3], 896
    $region25: #{tpu_custom_call.1} parent=1 // pred_fallthru
      _
    // Predicated region
    $region26: #{tpu_custom_call.1} parent=1 // pred_check
      _
    $region27: #{tpu_custom_call.1} parent=1 // pred_check_branch
      %55 = sbr.rel (0) target = $region29
    $region28: #{tpu_custom_call.1} parent=1 // pred_region
      %56 = dma.done [#allocation6], 6272
    $region29: #{tpu_custom_call.1} parent=1 // pred_fallthru
      _
    // Predicated region
    $region30: #{tpu_custom_call.1} parent=1 // pred_check
      _
    $region31: #{tpu_custom_call.1} parent=1 // pred_check_branch
      %58 = sbr.rel (0) target = $region33
    $region32: #{tpu_custom_call.1} parent=1 // pred_region
      %59 = dma.done [#allocation6], 1024
    $region33: #{tpu_custom_call.1} parent=1 // pred_fallthru
      _
    %v61 = vld [vmem:[#allocation2] sm:$0xff]
    %v62 = vld [vmem:[#allocation2 + $0x8] sm:$0xff]
    %v63 = vld [vmem:[#allocation2 + $0x10] sm:$0xff]
    %v64 = vld [vmem:[#allocation2 + $0x18] sm:$0xff]
    %v65 = vld [vmem:[#allocation2 + $0x20] sm:$0xff]
    %v66 = vld [vmem:[#allocation2 + $0x28] sm:$0xff]
    %v67 = vld [vmem:[#allocation2 + $0x30] sm:$0xff]
    %v68 = vpack.c.bf16 %v61, %v61
    %v69 = vpack.c.bf16 %v62, %v62
    %v70 = vpack.c.bf16 %v63, %v63
    %v71 = vpack.c.bf16 %v64, %v64
    %v72 = vpack.c.bf16 %v65, %v65
    %v73 = vpack.c.bf16 %v66, %v66
    %v74 = vpack.c.bf16 %v67, %v67
    %v75 = vld [vmem:[#allocation5] sm:$0xf]
    %v76 = vld [vmem:[#allocation5 + $0x4] sm:$0xf]
    %v77 = vld [vmem:[#allocation5 + $0x8] sm:$0xf]
    %v78 = vld [vmem:[#allocation5 + $0xc] sm:$0xf]
    %v79 = vld [vmem:[#allocation5 + $0x10] sm:$0xf]
    %v80 = vld [vmem:[#allocation5 + $0x14] sm:$0xf]
    %v81 = vld [vmem:[#allocation5 + $0x18] sm:$0xf]
    %v82 = vld [vmem:[#allocation5 + $0x1c] sm:$0xf]
    %v83 = vld [vmem:[#allocation5 + $0x20] sm:$0xf]
    %v84 = vld [vmem:[#allocation5 + $0x24] sm:$0xf]
    %v85 = vld [vmem:[#allocation5 + $0x28] sm:$0xf]
    %v86 = vld [vmem:[#allocation5 + $0x2c] sm:$0xf]
    %v87 = vld [vmem:[#allocation5 + $0x30] sm:$0xf]
    %v88 = vld [vmem:[#allocation5 + $0x34] sm:$0xf]
    %v89 = vld [vmem:[#allocation5 + $0x38] sm:$0xf]
    %v90 = vld [vmem:[#allocation5 + $0x3c] sm:$0xf]
    %v91 = vld [vmem:[#allocation5 + $0x40] sm:$0xf]
    %v92 = vld [vmem:[#allocation5 + $0x44] sm:$0xf]
    %v93 = vld [vmem:[#allocation5 + $0x48] sm:$0xf]
    %v94 = vld [vmem:[#allocation5 + $0x4c] sm:$0xf]
    %v95 = vld [vmem:[#allocation5 + $0x50] sm:$0xf]
    %v96 = vld [vmem:[#allocation5 + $0x54] sm:$0xf]
    %v97 = vld [vmem:[#allocation5 + $0x58] sm:$0xf]
    %v98 = vld [vmem:[#allocation5 + $0x5c] sm:$0xf]
    %v99 = vld [vmem:[#allocation5 + $0x60] sm:$0xf]
    %v100 = vld [vmem:[#allocation5 + $0x64] sm:$0xf]
    %v101 = vld [vmem:[#allocation5 + $0x68] sm:$0xf]
    %v102 = vld [vmem:[#allocation5 + $0x6c] sm:$0xf]
    %v103 = vld [vmem:[#allocation5 + $0x70] sm:$0xf]
    %v104 = vld [vmem:[#allocation5 + $0x74] sm:$0xf]
    %v105 = vld [vmem:[#allocation5 + $0x78] sm:$0xf]
    %v106 = vld [vmem:[#allocation5 + $0x7c] sm:$0xf]
    %v107 = vld [vmem:[#allocation5 + $0x80] sm:$0xf]
    %v108 = vld [vmem:[#allocation5 + $0x84] sm:$0xf]
    %v109 = vld [vmem:[#allocation5 + $0x88] sm:$0xf]
    %v110 = vld [vmem:[#allocation5 + $0x8c] sm:$0xf]
    %v111 = vld [vmem:[#allocation5 + $0x90] sm:$0xf]
    %v112 = vld [vmem:[#allocation5 + $0x94] sm:$0xf]
    %v113 = vld [vmem:[#allocation5 + $0x98] sm:$0xf]
    %v114 = vld [vmem:[#allocation5 + $0x9c] sm:$0xf]
    %v115 = vld [vmem:[#allocation5 + $0xa0] sm:$0xf]
    %v116 = vld [vmem:[#allocation5 + $0xa4] sm:$0xf]
    %v117 = vld [vmem:[#allocation5 + $0xa8] sm:$0xf]
    %v118 = vld [vmem:[#allocation5 + $0xac] sm:$0xf]
    %v119 = vld [vmem:[#allocation5 + $0xb0] sm:$0xf]
    %v120 = vld [vmem:[#allocation5 + $0xb4] sm:$0xf]
    %v121 = vld [vmem:[#allocation5 + $0xb8] sm:$0xf]
    %v122 = vld [vmem:[#allocation5 + $0xbc] sm:$0xf]
    %v123 = vld [vmem:[#allocation5 + $0xc0] sm:$0xf]
    %v124 = vld [vmem:[#allocation5 + $0xc4] sm:$0xf]
    %v125 = vld [vmem:[#allocation5 + $0xc8] sm:$0xf]
    %v126 = vld [vmem:[#allocation5 + $0xcc] sm:$0xf]
    %v127 = vld [vmem:[#allocation5 + $0xd0] sm:$0xf]
    %v128 = vld [vmem:[#allocation5 + $0xd4] sm:$0xf]
    %v129 = vld [vmem:[#allocation5 + $0xd8] sm:$0xf]
    %v130 = vld [vmem:[#allocation5 + $0xdc] sm:$0xf]
    %v131 = vld [vmem:[#allocation5 + $0xe0] sm:$0xf]
    %v132 = vld [vmem:[#allocation5 + $0xe4] sm:$0xf]
    %v133 = vld [vmem:[#allocation5 + $0xe8] sm:$0xf]
    %v134 = vld [vmem:[#allocation5 + $0xec] sm:$0xf]
    %v135 = vld [vmem:[#allocation5 + $0xf0] sm:$0xf]
    %v136 = vld [vmem:[#allocation5 + $0xf4] sm:$0xf]
    %v137 = vld [vmem:[#allocation5 + $0xf8] sm:$0xf]
    %v138 = vld [vmem:[#allocation5 + $0xfc] sm:$0xf]
    %v139 = vld [vmem:[#allocation5 + $0x100] sm:$0xf]
    %v140 = vld [vmem:[#allocation5 + $0x104] sm:$0xf]
    %v141 = vld [vmem:[#allocation5 + $0x108] sm:$0xf]
    %v142 = vld [vmem:[#allocation5 + $0x10c] sm:$0xf]
    %v143 = vld [vmem:[#allocation5 + $0x110] sm:$0xf]
    %v144 = vld [vmem:[#allocation5 + $0x114] sm:$0xf]
    %v145 = vld [vmem:[#allocation5 + $0x118] sm:$0xf]
    %v146 = vld [vmem:[#allocation5 + $0x11c] sm:$0xf]
    %v147 = vld [vmem:[#allocation5 + $0x120] sm:$0xf]
    %v148 = vld [vmem:[#allocation5 + $0x124] sm:$0xf]
    %v149 = vld [vmem:[#allocation5 + $0x128] sm:$0xf]
    %v150 = vld [vmem:[#allocation5 + $0x12c] sm:$0xf]
    %v151 = vld [vmem:[#allocation5 + $0x130] sm:$0xf]
    %v152 = vld [vmem:[#allocation5 + $0x134] sm:$0xf]
    %v153 = vld [vmem:[#allocation5 + $0x138] sm:$0xf]
    %v154 = vld [vmem:[#allocation5 + $0x13c] sm:$0xf]
    %v155 = vld [vmem:[#allocation5 + $0x140] sm:$0xf]
    %v156 = vld [vmem:[#allocation5 + $0x144] sm:$0xf]
    %v157 = vld [vmem:[#allocation5 + $0x148] sm:$0xf]
    %v158 = vld [vmem:[#allocation5 + $0x14c] sm:$0xf]
    %v159 = vld [vmem:[#allocation5 + $0x150] sm:$0xf]
    %v160 = vld [vmem:[#allocation5 + $0x154] sm:$0xf]
    %v161 = vld [vmem:[#allocation5 + $0x158] sm:$0xf]
    %v162 = vld [vmem:[#allocation5 + $0x15c] sm:$0xf]
    %v163 = vld [vmem:[#allocation5 + $0x160] sm:$0xf]
    %v164 = vld [vmem:[#allocation5 + $0x164] sm:$0xf]
    %v165 = vld [vmem:[#allocation5 + $0x168] sm:$0xf]
    %v166 = vld [vmem:[#allocation5 + $0x16c] sm:$0xf]
    %v167 = vld [vmem:[#allocation5 + $0x170] sm:$0xf]
    %v168 = vld [vmem:[#allocation5 + $0x174] sm:$0xf]
    %v169 = vld [vmem:[#allocation5 + $0x178] sm:$0xf]
    %v170 = vld [vmem:[#allocation5 + $0x17c] sm:$0xf]
    %v171 = vld [vmem:[#allocation5 + $0x180] sm:$0xf]
    %v172 = vld [vmem:[#allocation5 + $0x184] sm:$0xf]
    %v173 = vld [vmem:[%s2] sm:$0x1]
    %v175 = vlaneseq
    %v176 = vshrl.u32 %v175, 7
    %v177 = vsub.s32 0, %v176
    %v178 = vrot.slane %v173, %v177
    %v278 = vunpack.c.l.b16 %v75
    %v279 = vunpack.c.l.b16 %v76
    %v280 = vunpack.c.l.b16 %v77
    %v281 = vunpack.c.l.b16 %v78
    %v282 = vunpack.c.l.b16 %v79
    %v283 = vunpack.c.l.b16 %v80
    %v284 = vunpack.c.l.b16 %v81
    %v285 = vunpack.c.l.b16 %v82
    %v286 = vunpack.c.l.b16 %v83
    %v287 = vunpack.c.l.b16 %v84
    %v288 = vunpack.c.l.b16 %v85
    %v289 = vunpack.c.l.b16 %v86
    %v290 = vunpack.c.l.b16 %v87
    %v291 = vunpack.c.l.b16 %v88
    %v292 = vunpack.c.l.b16 %v89
    %v293 = vunpack.c.l.b16 %v90
    %v294 = vunpack.c.l.b16 %v91
    %v295 = vunpack.c.l.b16 %v92
    %v296 = vunpack.c.l.b16 %v93
    %v297 = vunpack.c.l.b16 %v94
    %v298 = vunpack.c.l.b16 %v95
    %v299 = vunpack.c.l.b16 %v96
    %v300 = vunpack.c.l.b16 %v97
    %v301 = vunpack.c.l.b16 %v98
    %v302 = vunpack.c.l.b16 %v99
    %v303 = vunpack.c.l.b16 %v100
    %v304 = vunpack.c.l.b16 %v101
    %v305 = vunpack.c.l.b16 %v102
    %v306 = vunpack.c.l.b16 %v103
    %v307 = vunpack.c.l.b16 %v104
    %v308 = vunpack.c.l.b16 %v105
    %v309 = vunpack.c.l.b16 %v106
    %v310 = vunpack.c.l.b16 %v107
    %v311 = vunpack.c.l.b16 %v108
    %v312 = vunpack.c.l.b16 %v109
    %v313 = vunpack.c.l.b16 %v110
    %v314 = vunpack.c.l.b16 %v111
    %v315 = vunpack.c.l.b16 %v112
    %v316 = vunpack.c.l.b16 %v113
    %v317 = vunpack.c.l.b16 %v114
    %v318 = vunpack.c.l.b16 %v115
    %v319 = vunpack.c.l.b16 %v116
    %v320 = vunpack.c.l.b16 %v117
    %v321 = vunpack.c.l.b16 %v118
    %v322 = vunpack.c.l.b16 %v119
    %v323 = vunpack.c.l.b16 %v120
    %v324 = vunpack.c.l.b16 %v121
    %v325 = vunpack.c.l.b16 %v122
    %v326 = vunpack.c.l.b16 %v123
    %v327 = vunpack.c.l.b16 %v124
    %v328 = vunpack.c.l.b16 %v125
    %v329 = vunpack.c.l.b16 %v126
    %v330 = vunpack.c.l.b16 %v127
    %v331 = vunpack.c.l.b16 %v128
    %v332 = vunpack.c.l.b16 %v129
    %v333 = vunpack.c.l.b16 %v130
    %v334 = vunpack.c.l.b16 %v131
    %v335 = vunpack.c.l.b16 %v132
    %v336 = vunpack.c.l.b16 %v133
    %v337 = vunpack.c.l.b16 %v134
    %v338 = vunpack.c.l.b16 %v135
    %v339 = vunpack.c.l.b16 %v136
    %v340 = vunpack.c.l.b16 %v137
    %v341 = vunpack.c.l.b16 %v138
    %v342 = vunpack.c.l.b16 %v139
    %v343 = vunpack.c.l.b16 %v140
    %v344 = vunpack.c.l.b16 %v141
    %v345 = vunpack.c.l.b16 %v142
    %v346 = vunpack.c.l.b16 %v143
    %v347 = vunpack.c.l.b16 %v144
    %v348 = vunpack.c.l.b16 %v145
    %v349 = vunpack.c.l.b16 %v146
    %v350 = vunpack.c.l.b16 %v147
    %v351 = vunpack.c.l.b16 %v148
    %v352 = vunpack.c.l.b16 %v149
    %v353 = vunpack.c.l.b16 %v150
    %v354 = vunpack.c.l.b16 %v151
    %v355 = vunpack.c.l.b16 %v152
    %v356 = vunpack.c.l.b16 %v153
    %v357 = vunpack.c.l.b16 %v154
    %v358 = vunpack.c.l.b16 %v155
    %v359 = vunpack.c.l.b16 %v156
    %v360 = vunpack.c.l.b16 %v157
    %v361 = vunpack.c.l.b16 %v158
    %v362 = vunpack.c.l.b16 %v159
    %v363 = vunpack.c.l.b16 %v160
    %v364 = vunpack.c.l.b16 %v161
    %v365 = vunpack.c.l.b16 %v162
    %v366 = vunpack.c.l.b16 %v163
    %v367 = vunpack.c.l.b16 %v164
    %v368 = vunpack.c.l.b16 %v165
    %v369 = vunpack.c.l.b16 %v166
    %v370 = vunpack.c.l.b16 %v167
    %v371 = vunpack.c.l.b16 %v168
    %v372 = vunpack.c.l.b16 %v169
    %v373 = vunpack.c.l.b16 %v170
    %v374 = vunpack.c.l.b16 %v171
    %v375 = vunpack.c.l.b16 %v172
    %v376 = vpack.c.b16 %v279, %v278
    %v377 = vpack.c.b16 %v281, %v280
    %v378 = vpack.c.b16 %v283, %v282
    %v379 = vpack.c.b16 %v285, %v284
    %v380 = vpack.c.b16 %v287, %v286
    %v381 = vpack.c.b16 %v289, %v288
    %v382 = vpack.c.b16 %v291, %v290
    %v383 = vpack.c.b16 %v293, %v292
    %v384 = vpack.c.b16 %v295, %v294
    %v385 = vpack.c.b16 %v297, %v296
    %v386 = vpack.c.b16 %v299, %v298
    %v387 = vpack.c.b16 %v301, %v300
    %v388 = vpack.c.b16 %v303, %v302
    %v389 = vpack.c.b16 %v305, %v304
    %v390 = vpack.c.b16 %v307, %v306
    %v391 = vpack.c.b16 %v309, %v308
    %v392 = vpack.c.b16 %v311, %v310
    %v393 = vpack.c.b16 %v313, %v312
    %v394 = vpack.c.b16 %v315, %v314
    %v395 = vpack.c.b16 %v317, %v316
    %v396 = vpack.c.b16 %v319, %v318
    %v397 = vpack.c.b16 %v321, %v320
    %v398 = vpack.c.b16 %v323, %v322
    %v399 = vpack.c.b16 %v325, %v324
    %v400 = vpack.c.b16 %v327, %v326
    %v401 = vpack.c.b16 %v329, %v328
    %v402 = vpack.c.b16 %v331, %v330
    %v403 = vpack.c.b16 %v333, %v332
    %v404 = vpack.c.b16 %v335, %v334
    %v405 = vpack.c.b16 %v337, %v336
    %v406 = vpack.c.b16 %v339, %v338
    %v407 = vpack.c.b16 %v341, %v340
    %v408 = vpack.c.b16 %v343, %v342
    %v409 = vpack.c.b16 %v345, %v344
    %v410 = vpack.c.b16 %v347, %v346
    %v411 = vpack.c.b16 %v349, %v348
    %v412 = vpack.c.b16 %v351, %v350
    %v413 = vpack.c.b16 %v353, %v352
    %v414 = vpack.c.b16 %v355, %v354
    %v415 = vpack.c.b16 %v357, %v356
    %v416 = vpack.c.b16 %v359, %v358
    %v417 = vpack.c.b16 %v361, %v360
    %v418 = vpack.c.b16 %v363, %v362
    %v419 = vpack.c.b16 %v365, %v364
    %v420 = vpack.c.b16 %v367, %v366
    %v421 = vpack.c.b16 %v369, %v368
    %v422 = vpack.c.b16 %v371, %v370
    %v423 = vpack.c.b16 %v373, %v372
    %v424 = vpack.c.b16 %v375, %v374
    %vm474 = vcmask 130048
    %v476 = vsel %vm474, %v74, 0
    %478 = vmatprep.subr.bf16.mxu0 0
    %479 = vmatpush1.bf16.msra.mxu0 %v376
    %480 = vmatprep.subr.bf16.mxu0 0
    %481 = vmatpush1.bf16.msra.mxu0 %v377
    %482 = vmatprep.subr.bf16.mxu0 0
    %483 = vmatpush1.bf16.msra.mxu0 %v378
    %484 = vmatprep.subr.bf16.mxu0 0
    %485 = vmatpush1.bf16.msra.mxu0 %v379
    %486 = vmatprep.subr.bf16.mxu0 0
    %487 = vmatpush1.bf16.msra.mxu0 %v380
    %488 = vmatprep.subr.bf16.mxu0 0
    %489 = vmatpush1.bf16.msra.mxu0 %v381
    %490 = vmatprep.subr.bf16.mxu0 0
    %491 = vmatpush1.bf16.msra.mxu0 %v382
    %492 = vmatprep.subr.bf16.mxu0 0
    %493 = vmatpush1.bf16.msra.mxu0 %v383
    %494 = vmatprep.subr.bf16.mxu0 0
    %495 = vmatpush1.bf16.msra.mxu0 %v384
    %496 = vmatprep.subr.bf16.mxu0 0
    %497 = vmatpush1.bf16.msra.mxu0 %v385
    %498 = vmatprep.subr.bf16.mxu0 0
    %499 = vmatpush1.bf16.msra.mxu0 %v386
    %500 = vmatprep.subr.bf16.mxu0 0
    %501 = vmatpush1.bf16.msra.mxu0 %v387
    %502 = vmatprep.subr.bf16.mxu0 0
    %503 = vmatpush1.bf16.msra.mxu0 %v388
    %504 = vmatprep.subr.bf16.mxu0 0
    %505 = vmatpush1.bf16.msra.mxu0 %v389
    %506 = vmatprep.subr.bf16.mxu0 0
    %507 = vmatpush1.bf16.msra.mxu0 %v390
    %508 = vmatprep.subr.bf16.mxu0 0
    %509 = vmatpush1.bf16.msra.mxu0 %v391
    %510 = vmatprep.mubr.bf16.mxu0 %v69
    %511 = vmatmul.mubr.bf16.gmra.mrb[0].mxu0 %v68
    %v512 = vpop.f32.mrb[0].mxu0
    %v513 = vadd.f32 %v178, %v512
    %v514 = vpop.f32.mrb[0].mxu0
    %v515 = vpop.f32.mrb[0].mxu0
    %v516 = vpop.f32.mrb[0].mxu0
    %517 = vdwg.mxu0
    %518 = vmatprep.subr.bf16.mxu0 0
    %519 = vmatpush1.bf16.msra.mxu0 %v392
    %520 = vmatprep.subr.bf16.mxu0 0
    %521 = vmatpush1.bf16.msra.mxu0 %v393
    %522 = vmatprep.subr.bf16.mxu0 0
    %523 = vmatpush1.bf16.msra.mxu0 %v394
    %524 = vmatprep.subr.bf16.mxu0 0
    %525 = vmatpush1.bf16.msra.mxu0 %v395
    %526 = vmatprep.subr.bf16.mxu0 0
    %527 = vmatpush1.bf16.msra.mxu0 %v396
    %528 = vmatprep.subr.bf16.mxu0 0
    %529 = vmatpush1.bf16.msra.mxu0 %v397
    %530 = vmatprep.subr.bf16.mxu0 0
    %531 = vmatpush1.bf16.msra.mxu0 %v398
    %532 = vmatprep.subr.bf16.mxu0 0
    %533 = vmatpush1.bf16.msra.mxu0 %v399
    %534 = vmatprep.subr.bf16.mxu0 0
    %535 = vmatpush1.bf16.msra.mxu0 %v400
    %536 = vmatprep.subr.bf16.mxu0 0
    %537 = vmatpush1.bf16.msra.mxu0 %v401
    %538 = vmatprep.subr.bf16.mxu0 0
    %539 = vmatpush1.bf16.msra.mxu0 %v402
    %540 = vmatprep.subr.bf16.mxu0 0
    %541 = vmatpush1.bf16.msra.mxu0 %v403
    %542 = vmatprep.subr.bf16.mxu0 0
    %543 = vmatpush1.bf16.msra.mxu0 %v404
    %544 = vmatprep.subr.bf16.mxu0 0
    %545 = vmatpush1.bf16.msra.mxu0 %v405
    %546 = vmatprep.subr.bf16.mxu0 0
    %547 = vmatpush1.bf16.msra.mxu0 %v406
    %548 = vmatprep.subr.bf16.mxu0 0
    %549 = vmatpush1.bf16.msra.mxu0 %v407
    %550 = vmatprep.mubr.bf16.mxu0 %v71
    %551 = vmatmul.mubr.bf16.gmra.mrb[0].mxu0 %v70
    %v552 = vpop.f32.mrb[0].mxu0
    %v553 = vadd.f32 %v513, %v552
    %v554 = vpop.f32.mrb[0].mxu0
    %v555 = vpop.f32.mrb[0].mxu0
    %v556 = vpop.f32.mrb[0].mxu0
    %557 = vdwg.mxu0
    %558 = vmatprep.subr.bf16.mxu0 0
    %559 = vmatpush1.bf16.msra.mxu0 %v408
    %560 = vmatprep.subr.bf16.mxu0 0
    %561 = vmatpush1.bf16.msra.mxu0 %v409
    %562 = vmatprep.subr.bf16.mxu0 0
    %563 = vmatpush1.bf16.msra.mxu0 %v410
    %564 = vmatprep.subr.bf16.mxu0 0
    %565 = vmatpush1.bf16.msra.mxu0 %v411
    %566 = vmatprep.subr.bf16.mxu0 0
    %567 = vmatpush1.bf16.msra.mxu0 %v412
    %568 = vmatprep.subr.bf16.mxu0 0
    %569 = vmatpush1.bf16.msra.mxu0 %v413
    %570 = vmatprep.subr.bf16.mxu0 0
    %571 = vmatpush1.bf16.msra.mxu0 %v414
    %572 = vmatprep.subr.bf16.mxu0 0
    %573 = vmatpush1.bf16.msra.mxu0 %v415
    %574 = vmatprep.subr.bf16.mxu0 0
    %575 = vmatpush1.bf16.msra.mxu0 %v416
    %576 = vmatprep.subr.bf16.mxu0 0
    %577 = vmatpush1.bf16.msra.mxu0 %v417
    %578 = vmatprep.subr.bf16.mxu0 0
    %579 = vmatpush1.bf16.msra.mxu0 %v418
    %580 = vmatprep.subr.bf16.mxu0 0
    %581 = vmatpush1.bf16.msra.mxu0 %v419
    %582 = vmatprep.subr.bf16.mxu0 0
    %583 = vmatpush1.bf16.msra.mxu0 %v420
    %584 = vmatprep.subr.bf16.mxu0 0
    %585 = vmatpush1.bf16.msra.mxu0 %v421
    %586 = vmatprep.subr.bf16.mxu0 0
    %587 = vmatpush1.bf16.msra.mxu0 %v422
    %588 = vmatprep.subr.bf16.mxu0 0
    %589 = vmatpush1.bf16.msra.mxu0 %v423
    %590 = vmatprep.mubr.bf16.mxu0 %v73
    %591 = vmatmul.mubr.bf16.gmra.mrb[0].mxu0 %v72
    %v592 = vpop.f32.mrb[0].mxu0
    %v593 = vadd.f32 %v553, %v592
    %v594 = vpop.f32.mrb[0].mxu0
    %v595 = vpop.f32.mrb[0].mxu0
    %v596 = vpop.f32.mrb[0].mxu0
    %597 = vdwg.mxu0
    %598 = vmatprep.subr.bf16.mxu0 0
    %599 = vmatpush1.bf16.msra.mxu0 %v424
    %600 = vmatprep.subr.bf16.mxu0 0
    %601 = vmatpush1.bf16.msra.mxu0 0
    %602 = vmatprep.subr.bf16.mxu0 0
    %603 = vmatpush1.bf16.msra.mxu0 0
    %604 = vmatprep.subr.bf16.mxu0 0
    %605 = vmatpush1.bf16.msra.mxu0 0
    %606 = vmatprep.subr.bf16.mxu0 0
    %607 = vmatpush1.bf16.msra.mxu0 0
    %608 = vmatprep.subr.bf16.mxu0 0
    %609 = vmatpush1.bf16.msra.mxu0 0
    %610 = vmatprep.subr.bf16.mxu0 0
    %611 = vmatpush1.bf16.msra.mxu0 0
    %612 = vmatprep.subr.bf16.mxu0 0
    %613 = vmatpush1.bf16.msra.mxu0 0
    %614 = vmatprep.subr.bf16.mxu0 0
    %615 = vmatpush1.bf16.msra.mxu0 0
    %616 = vmatprep.subr.bf16.mxu0 0
    %617 = vmatpush1.bf16.msra.mxu0 0
    %618 = vmatprep.subr.bf16.mxu0 0
    %619 = vmatpush1.bf16.msra.mxu0 0
    %620 = vmatprep.subr.bf16.mxu0 0
    %621 = vmatpush1.bf16.msra.mxu0 0
    %622 = vmatprep.subr.bf16.mxu0 0
    %623 = vmatpush1.bf16.msra.mxu0 0
    %624 = vmatprep.subr.bf16.mxu0 0
    %625 = vmatpush1.bf16.msra.mxu0 0
    %626 = vmatprep.subr.bf16.mxu0 0
    %627 = vmatpush1.bf16.msra.mxu0 0
    %628 = vmatprep.subr.bf16.mxu0 0
    %629 = vmatpush1.bf16.msra.mxu0 0
    %630 = vmatprep.mubr.bf16.mxu0 0
    %631 = vmatmul.mubr.bf16.gmra.mrb[0].mxu0 %v476
    %v632 = vpop.f32.mrb[0].mxu0
    %v633 = vadd.f32 %v593, %v632
    %v634 = vpop.f32.mrb[0].mxu0
    %v635 = vpop.f32.mrb[0].mxu0
    %v636 = vpop.f32.mrb[0].mxu0
    %637 = vdwg.mxu0
    %v638 = vmax.f32 %v633, 0.0
    %v639 = vpack.c.bf16 %v638, %v638
    %v640 = vld [vmem:[#allocation7] sm:$0xf]
    %v641 = vld [vmem:[#allocation7 + $0x4] sm:$0xf]
    %v642 = vld [vmem:[#allocation7 + $0x8] sm:$0xf]
    %v643 = vld [vmem:[#allocation7 + $0xc] sm:$0xf]
    %v644 = vld [vmem:[#allocation7 + $0x10] sm:$0xf]
    %v645 = vld [vmem:[#allocation7 + $0x14] sm:$0xf]
    %v646 = vld [vmem:[#allocation7 + $0x18] sm:$0xf]
    %v647 = vld [vmem:[#allocation7 + $0x1c] sm:$0xf]
    %v648 = vld [vmem:[#allocation7 + $0x20] sm:$0xf]
    %v649 = vld [vmem:[#allocation7 + $0x24] sm:$0xf]
    %v650 = vld [vmem:[#allocation7 + $0x28] sm:$0xf]
    %v651 = vld [vmem:[#allocation7 + $0x2c] sm:$0xf]
    %v652 = vld [vmem:[#allocation7 + $0x30] sm:$0xf]
    %v653 = vld [vmem:[#allocation7 + $0x34] sm:$0xf]
    %v654 = vld [vmem:[#allocation7 + $0x38] sm:$0xf]
    %v655 = vld [vmem:[#allocation7 + $0x3c] sm:$0xf]
    %v656 = vld [vmem:[%s4] sm:$0x1]
    %v658 = vlaneseq
    %v659 = vshrl.u32 %v658, 7
    %v660 = vsub.s32 0, %v659
    %v661 = vrot.slane %v656, %v660
    %v679 = vunpack.c.l.b16 %v640
    %v680 = vunpack.c.l.b16 %v641
    %v681 = vunpack.c.l.b16 %v642
    %v682 = vunpack.c.l.b16 %v643
    %v683 = vunpack.c.l.b16 %v644
    %v684 = vunpack.c.l.b16 %v645
    %v685 = vunpack.c.l.b16 %v646
    %v686 = vunpack.c.l.b16 %v647
    %v687 = vunpack.c.l.b16 %v648
    %v688 = vunpack.c.l.b16 %v649
    %v689 = vunpack.c.l.b16 %v650
    %v690 = vunpack.c.l.b16 %v651
    %v691 = vunpack.c.l.b16 %v652
    %v692 = vunpack.c.l.b16 %v653
    %v693 = vunpack.c.l.b16 %v654
    %v694 = vunpack.c.l.b16 %v655
    %v695 = vpack.c.b16 %v680, %v679
    %v696 = vpack.c.b16 %v682, %v681
    %v697 = vpack.c.b16 %v684, %v683
    %v698 = vpack.c.b16 %v686, %v685
    %v699 = vpack.c.b16 %v688, %v687
    %v700 = vpack.c.b16 %v690, %v689
    %v701 = vpack.c.b16 %v692, %v691
    %v702 = vpack.c.b16 %v694, %v693
    %711 = vmatprep.subr.bf16.mxu0 0
    %712 = vmatpush1.bf16.msra.mxu0 %v695
    %713 = vmatprep.subr.bf16.mxu0 0
    %714 = vmatpush1.bf16.msra.mxu0 %v696
    %715 = vmatprep.subr.bf16.mxu0 0
    %716 = vmatpush1.bf16.msra.mxu0 %v697
    %717 = vmatprep.subr.bf16.mxu0 0
    %718 = vmatpush1.bf16.msra.mxu0 %v698
    %719 = vmatprep.subr.bf16.mxu0 0
    %720 = vmatpush1.bf16.msra.mxu0 %v699
    %721 = vmatprep.subr.bf16.mxu0 0
    %722 = vmatpush1.bf16.msra.mxu0 %v700
    %723 = vmatprep.subr.bf16.mxu0 0
    %724 = vmatpush1.bf16.msra.mxu0 %v701
    %725 = vmatprep.subr.bf16.mxu0 0
    %726 = vmatpush1.bf16.msra.mxu0 %v702
    %727 = vmatprep.subr.bf16.mxu0 0
    %728 = vmatpush1.bf16.msra.mxu0 0
    %729 = vmatprep.subr.bf16.mxu0 0
    %730 = vmatpush1.bf16.msra.mxu0 0
    %731 = vmatprep.subr.bf16.mxu0 0
    %732 = vmatpush1.bf16.msra.mxu0 0
    %733 = vmatprep.subr.bf16.mxu0 0
    %734 = vmatpush1.bf16.msra.mxu0 0
    %735 = vmatprep.subr.bf16.mxu0 0
    %736 = vmatpush1.bf16.msra.mxu0 0
    %737 = vmatprep.subr.bf16.mxu0 0
    %738 = vmatpush1.bf16.msra.mxu0 0
    %739 = vmatprep.subr.bf16.mxu0 0
    %740 = vmatpush1.bf16.msra.mxu0 0
    %741 = vmatprep.subr.bf16.mxu0 0
    %742 = vmatpush1.bf16.msra.mxu0 0
    %743 = vmatprep.mubr.bf16.mxu0 0
    %744 = vmatmul.mubr.bf16.gmra.mrb[0].mxu0 %v639
    %v745 = vpop.f32.mrb[0].mxu0
    %v746 = vadd.f32 %v661, %v745
    %v747 = vpop.f32.mrb[0].mxu0
    %v748 = vpop.f32.mrb[0].mxu0
    %v749 = vpop.f32.mrb[0].mxu0
    %750 = vdwg.mxu0
    %vm751 = vcmask 80896
    %752 = vst.msk [vmem:[#allocation8] sm:$0xff] %vm751, %v746
    // Predicated region
    $region34: #{tpu_custom_call.1} parent=1 // pred_check
      _
    $region35: #{tpu_custom_call.1} parent=1 // pred_check_branch
      %754 = sbr.rel (0) target = $region37
    $region36: #{tpu_custom_call.1} parent=1 // pred_region
      %s756 = ssub.s32 128, 128
      %757 = vsyncadd [#allocation4], %s756
      %s759 = sshll.u32 [#allocation8], 4
      %s760 = int_to_ptr.vmem [resolvable:$true] %s759
      %762 = dma.vmem_to_hbm [thread:$0]  %s760, 128, %s5, [#allocation4]
    $region37: #{tpu_custom_call.1} parent=1 // pred_fallthru
      _
    // Predicated region
    $region38: #{tpu_custom_call.1} parent=1 // pred_check
      _
    $region39: #{tpu_custom_call.1} parent=1 // pred_check_branch
      %764 = sbr.rel (0) target = $region41
    $region40: #{tpu_custom_call.1} parent=1 // pred_region
      %765 = dma.done [#allocation4], 128
    $region41: #{tpu_custom_call.1} parent=1 // pred_fallthru
      _
    %766 = vsyncpa [#allocation3], 1
    %767 = vsyncpa [#allocation6], 1
    %768 = vsyncpa [#allocation4], 1

</llo_original>
